<compile_context>
chip_gen: v7x
topology: tpu7x:2x2x1
jax: 0.10.0
libtpu: 0.0.40
codegen_flags: <defaults>
</compile_context>

<pallas_src>
import functools

import numpy as np
import jax
import jax.numpy as jnp
from jax import lax
from jax.experimental import pallas as pl
from jax.experimental.pallas import tpu as pltpu


# ----------------------------------------------------------------------------
# In-kernel helpers
# ----------------------------------------------------------------------------

def _cdist_mxu(a, b):
    """Pairwise Euclidean distance via the MXU form |a|^2 + |b|^2 - 2 a.b^T.

    [Na, D] x [Nb, D] -> [Na, Nb] (lane-dense along Nb).  This matches
    torch.cdist's default mm-based path for these row counts (> 25 rows).
    """
    bt = b.T                                                     # [D, Nb]
    ab = jnp.dot(a, bt, preferred_element_type=jnp.float32)      # [Na, Nb] (MXU)
    a2 = jnp.sum(a * a, axis=-1, keepdims=True)                  # [Na, 1] lane reduce
    b2 = jnp.sum(bt * bt, axis=0, keepdims=True)                 # [1, Nb] sublane reduce
    d2 = a2 + b2 - 2.0 * ab
    return jnp.sqrt(jnp.maximum(d2, 0.0))


def _sum_all_2d(x):
    """Full reduction of a 2-D array, kept 2-D ([R, C] -> [1, 1])."""
    return jnp.sum(jnp.sum(x, axis=1, keepdims=True), axis=0, keepdims=True)


_VMEM = pl.BlockSpec(memory_space=pltpu.MemorySpace.VMEM)
_SMEM = pl.BlockSpec(memory_space=pltpu.MemorySpace.SMEM)


# ----------------------------------------------------------------------------
# Kernel A: FFN(prototypes) -> pho, proto_mutual_loss (triu mean, SMEM scalar),
#           and the DBSCAN pairwise-distance matrix of primitive_feats.
# ----------------------------------------------------------------------------

def proto_kernel(x_ref, feats_ref, w1_ref, b1_ref, w2_ref, b2_ref, w3_ref, b3_ref,
                 pho_ref, fdist_ref, mloss_ref, msum_ref):
    # --- FFN (relu, relu, linear) + L2 post-normalize ---
    x = x_ref[...]                                                       # [P, H]
    h = jnp.dot(x, w1_ref[...], preferred_element_type=jnp.float32) + b1_ref[...]
    h = jnp.maximum(h, 0.0)
    h = jnp.dot(h, w2_ref[...], preferred_element_type=jnp.float32) + b2_ref[...]
    h = jnp.maximum(h, 0.0)
    h = jnp.dot(h, w3_ref[...], preferred_element_type=jnp.float32) + b3_ref[...]
    # F.normalize(p=2, dim=-1): x / max(||x||, 1e-12) == x * rsqrt(max(||x||^2, 1e-24))
    norm2 = jnp.sum(h * h, axis=-1, keepdims=True)
    pho = h * lax.rsqrt(jnp.maximum(norm2, 1e-24))                       # EUP rsqrt
    pho_ref[...] = pho

    # --- DBSCAN pairwise distances (host only does union-find on these) ---
    f = feats_ref[...]                                                   # [N, D]
    fdist_ref[...] = _cdist_mxu(f, f)                                    # [N, N]

    # --- proto_mutual_loss = mean over strict-upper-triangle of relu(2 - ||pho_i - pho_j||).
    # pho is finite by construction, so the original nanmean == plain mean with
    # the compile-time denominator P*(P-1)/2 (dead NaN masking removed).
    # v7x scaling guard: if num_prototypes is ever raised past ~2.5k, this
    # O(P^2) in-VMEM block should be tiled over pho row-tiles with SMEM
    # accumulators; at P=32 a single whole-array block is optimal.
    P = pho.shape[0]
    dmat = _cdist_mxu(pho, pho)                                          # [P, P]
    vals = jnp.maximum(2.0 - dmat, 0.0)
    rows = lax.broadcasted_iota(jnp.int32, (P, P), 0)
    cols = lax.broadcasted_iota(jnp.int32, (P, P), 1)
    triu = cols > rows                                                   # offset=1
    inv_denom = 2.0 / float(P * (P - 1))
    msum_ref[...] = _sum_all_2d(jnp.where(triu, vals, 0.0)) * inv_denom  # [1,1] VMEM
    # Scalar copy out through SMEM (no padded VMEM tile writeback for a scalar).
    mloss_ref[0, 0] = msum_ref[0, 0]


@jax.jit
def proto_forward(prototypes, feats, w1t, b1, w2t, b2, w3t, b3):
    P = prototypes.shape[0]
    N = feats.shape[0]
    Dout = w3t.shape[1]
    pho, fdist, mloss = pl.pallas_call(
        proto_kernel,
        out_shape=(jax.ShapeDtypeStruct((P, Dout), jnp.float32),
                   jax.ShapeDtypeStruct((N, N), jnp.float32),
                   jax.ShapeDtypeStruct((1, 1), jnp.float32)),
        in_specs=[_VMEM] * 8,
        out_specs=(_VMEM, _VMEM, _SMEM),
        scratch_shapes=[pltpu.VMEM((1, 1), jnp.float32)],
    )(prototypes, feats, w1t, b1, w2t, b2, w3t, b3)
    return pho, fdist, mloss[0, 0]


# ----------------------------------------------------------------------------
# Kernel B: on-device one-hot -> nan-aware cluster means miu -> cdist(pho, miu)
#           Hungarian cost matrix.  pho never leaves the device between kernels.
# ----------------------------------------------------------------------------

def cluster_cost_kernel(labels_ref, feats_ref, pho_ref, c_ref):
    lab = labels_ref[...]                                   # [1, N] int32 (DBSCAN labels)
    f = feats_ref[...]                                      # [N, D]
    K = c_ref.shape[1]
    N = f.shape[0]
    # One-hot built in-kernel (no host-built float [K, N] transfer).
    onehot = (lax.broadcasted_iota(jnp.int32, (K, N), 0) == lab).astype(jnp.float32)
    # nan-aware means kept on purpose: the original uses feats.nanmean(dim=0),
    # i.e. NaN primitive features are possible by spec.
    nanm = jnp.isnan(f)
    f0 = jnp.where(nanm, 0.0, f)
    valid = jnp.where(nanm, 0.0, 1.0)
    sums = jnp.dot(onehot, f0, preferred_element_type=jnp.float32)       # [K, D]
    counts = jnp.dot(onehot, valid, preferred_element_type=jnp.float32)  # [K, D]
    miu = sums / counts          # 0/0 -> NaN matches torch nanmean of an empty slice
    # Hungarian cost matrix, MXU form, lane-dense along K within the tile.
    c_ref[...] = _cdist_mxu(pho_ref[...], miu)              # [P, K]


@functools.partial(jax.jit, static_argnames=("num_clusters",))
def cluster_cost(labels2d, feats, pho, *, num_clusters):
    P = pho.shape[0]
    K = num_clusters
    return pl.pallas_call(
        cluster_cost_kernel,
        out_shape=jax.ShapeDtypeStruct((P, K), jnp.float32),
        in_specs=[_VMEM] * 3,
        out_specs=_VMEM,
    )(labels2d, feats, pho)


# ----------------------------------------------------------------------------
# Host-side helpers (these steps run on CPU in the original PyTorch module too)
# ----------------------------------------------------------------------------

def connected_component_labels(adj):
    # TODO(synk): sklearn DBSCAN has no Pallas equivalent; min_samples=1 ==
    # connected components of the eps-graph.  The pairwise distances are now
    # computed on device (kernel A); only this union-find runs on host.
    n = adj.shape[0]
    parent = np.arange(n)

    def find(i):
        while parent[i] != i:
            parent[i] = parent[parent[i]]
            i = parent[i]
        return i

    for i in range(n):
        for j in range(i + 1, n):
            if adj[i, j]:
                ri, rj = find(i), find(j)
                if ri != rj:
                    parent[rj] = ri

    labels = np.zeros(n, dtype=np.int64)
    seen = {}
    nxt = 0
    for i in range(n):
        r = find(i)
        if r not in seen:
            seen[r] = nxt
            nxt += 1
        labels[i] = seen[r]
    return labels


def hungarian(cost):
    # TODO(synk): scipy.optimize.linear_sum_assignment has no Pallas equivalent;
    # classic O(n^3) Hungarian (shortest augmenting path) in numpy on host.
    cost = np.asarray(cost, dtype=np.float64)
    transposed = False
    if cost.shape[0] > cost.shape[1]:
        cost = cost.T
        transposed = True
    n, m = cost.shape
    INF = float("inf")
    u = np.zeros(n + 1)
    v = np.zeros(m + 1)
    p = np.zeros(m + 1, dtype=np.int64)
    way = np.zeros(m + 1, dtype=np.int64)
    for i in range(1, n + 1):
        p[0] = i
        j0 = 0
        minv = np.full(m + 1, INF)
        used = np.zeros(m + 1, dtype=bool)
        while True:
            used[j0] = True
            i0 = p[j0]
            delta = INF
            j1 = 0
            for j in range(1, m + 1):
                if not used[j]:
                    cur = cost[i0 - 1, j - 1] - u[i0] - v[j]
                    if cur < minv[j]:
                        minv[j] = cur
                        way[j] = j0
                    if minv[j] < delta:
                        delta = minv[j]
                        j1 = j
            for j in range(m + 1):
                if used[j]:
                    u[p[j]] += delta
                    v[j] -= delta
                else:
                    minv[j] -= delta
            j0 = j1
            if p[j0] == 0:
                break
        while j0:
            j1 = way[j0]
            p[j0] = p[j1]
            j0 = j1
    row_to_col = np.full(n, -1, dtype=np.int64)
    for j in range(1, m + 1):
        if p[j] != 0:
            row_to_col[p[j] - 1] = j - 1
    rows = np.arange(n, dtype=np.int64)
    cols = row_to_col
    if transposed:
        rows, cols = cols, rows
        order = np.argsort(rows)
        rows, cols = rows[order], cols[order]
    return rows, cols


# ----------------------------------------------------------------------------
# Parser module (JAX / Pallas)
# ----------------------------------------------------------------------------

class ParserJAX:
    def __init__(self, dim_hidden=8, num_prototypes=32, dim_out=8, dbscan_eps=0.2):
        self.dim_hidden = dim_hidden
        self.num_prototypes = num_prototypes
        self.dim_out = dim_out
        self.dbscan_eps = dbscan_eps

        key = jax.random.PRNGKey(2025)
        ks = jax.random.split(key, 8)
        H, Dout = dim_hidden, dim_out

        def xavier(k, out_f, in_f):  # xavier_uniform_, weights stored [out, in]
            bound = float(np.sqrt(6.0 / (in_f + out_f)))
            return jax.random.uniform(k, (out_f, in_f), jnp.float32, -bound, bound)

        def bias(k, fan_in, n):  # default nn.Linear bias init
            bound = 1.0 / float(np.sqrt(fan_in))
            return jax.random.uniform(k, (1, n), jnp.float32, -bound, bound)

        w1 = xavier(ks[0], H, H); b1 = bias(ks[1], H, H)
        w2 = xavier(ks[2], H, H); b2 = bias(ks[3], H, H)
        w3 = xavier(ks[4], Dout, H); b3 = bias(ks[5], H, Dout)
        # kernels consume W^T so linear is x @ W^T + b, as in torch.
        self.ffn_params = (w1.T, b1, w2.T, b2, w3.T, b3)

        # nn.Embedding prototypes ~ N(0, 0.12)
        self.prototypes = 0.12 * jax.random.normal(ks[6], (num_prototypes, H), jnp.float32)

    def forward(self, primitive_feats):
        feats = jnp.asarray(primitive_feats, dtype=jnp.float32)

        # 1) Device (one fused kernel): FFN -> pho, proto_mutual_loss (SMEM
        #    scalar), and the DBSCAN pairwise-distance matrix of feats.
        pho, fdist, proto_mutual_loss = proto_forward(self.prototypes, feats,
                                                      *self.ffn_params)

        # 2) Host: DBSCAN(min_samples=1) == connected components of the
        #    eps-graph; only the union-find remains on host.
        fdist_np = np.asarray(fdist)
        labels = connected_component_labels(fdist_np <= self.dbscan_eps)
        K = int(labels.max() + 1)
        labels2d = jnp.asarray(labels.reshape(1, -1).astype(np.int32))

        # 3) Device: nan-aware cluster means miu + Hungarian cost matrix
        #    C[p, k] = ||pho[p] - miu[k]|| (pho stays resident on device).
        C = cluster_cost(labels2d, feats, pho, num_clusters=K)

        # 4) Host: Hungarian assignment.  NOTE: the original torch code does
        #    cdist(pho, miu).view(-1, P), i.e. a RAW row-major reshape of the
        #    [P, K] matrix into [K, P] (NOT a transpose) — reproduced
        #    faithfully with a free numpy reshape of the host copy.
        C_np = np.asarray(C)                                  # true [P, K] distances
        rows, cols = hungarian(C_np.reshape(-1, self.num_prototypes))

        # 5) Host gather (kernel C eliminated): parser_loss =
        #    nanmean ||pho[cols[i]] - miu[rows[i]]|| == nanmean(C[cols, rows]);
        #    no third pallas_call / device round-trip needed for a forward pass.
        parser_loss = np.float32(np.nanmean(C_np[cols, rows]))

        return {"parser_loss": parser_loss, "proto_mutual_loss": proto_mutual_loss}


# ----------------------------------------------------------------------------
# Demo
# ----------------------------------------------------------------------------

if __name__ == "__main__":
    key = jax.random.PRNGKey(0)
    dim_out = 8
    n_centers, pts_per = 4, 6

    kc, kn = jax.random.split(key)
    centers = jax.random.normal(kc, (n_centers, dim_out), jnp.float32)
    noise = 0.01 * jax.random.normal(kn, (n_centers, pts_per, dim_out), jnp.float32)
    primitive_feats = (centers[:, None, :] + noise).reshape(n_centers * pts_per, dim_out)

    parser = ParserJAX(dim_hidden=8, num_prototypes=32, dim_out=dim_out, dbscan_eps=0.2)
    out = parser.forward(primitive_feats)
    out = jax.block_until_ready(out)

    assert np.isfinite(float(out["parser_loss"]))
    assert np.isfinite(float(out["proto_mutual_loss"]))
    print("KERNEL_OK")
</pallas_src>

<mosaic_0001>
module attributes {stable_mosaic.version = 11 : i64} {
  func.func @proto_kernel(%arg0: memref<32x8xf32, #tpu.memory_space<vmem>>, %arg1: memref<24x8xf32, #tpu.memory_space<vmem>>, %arg2: memref<8x8xf32, #tpu.memory_space<vmem>>, %arg3: memref<1x8xf32, #tpu.memory_space<vmem>>, %arg4: memref<8x8xf32, #tpu.memory_space<vmem>>, %arg5: memref<1x8xf32, #tpu.memory_space<vmem>>, %arg6: memref<8x8xf32, #tpu.memory_space<vmem>>, %arg7: memref<1x8xf32, #tpu.memory_space<vmem>>, %arg8: memref<32x8xf32, #tpu.memory_space<vmem>>, %arg9: memref<24x24xf32, #tpu.memory_space<vmem>>, %arg10: memref<1x1xf32, #tpu.memory_space<smem>>, %arg11: memref<1x1xf32, #tpu.memory_space<vmem>>) attributes {dimension_semantics = [], scalar_prefetch = 0 : i64, scratch_operands = 1 : i64, tpu.core_type = #tpu.core_type<tc>} {
    %c0 = arith.constant 0 : index
    %c0_0 = arith.constant 0 : index
    %0 = vector.load %arg0[%c0, %c0_0] : memref<32x8xf32, #tpu.memory_space<vmem>>, vector<32x8xf32>
    %c0_1 = arith.constant 0 : index
    %c0_2 = arith.constant 0 : index
    %1 = vector.load %arg2[%c0_1, %c0_2] : memref<8x8xf32, #tpu.memory_space<vmem>>, vector<8x8xf32>
    %cst = arith.constant dense<0.000000e+00> : vector<32x8xf32>
    %2 = tpu.matmul %0, %1, %cst {dimension_numbers = #tpu.dot_dimension_numbers<[1], [0], [0], [1], [0, 0, 1, 1], [], []>} : vector<32x8xf32>, vector<8x8xf32>, vector<32x8xf32> -> vector<32x8xf32>
    %c0_3 = arith.constant 0 : index
    %c0_4 = arith.constant 0 : index
    %3 = vector.load %arg3[%c0_3, %c0_4] : memref<1x8xf32, #tpu.memory_space<vmem>>, vector<1x8xf32>
    %4 = vector.broadcast %3 : vector<1x8xf32> to vector<32x8xf32>
    %5 = arith.addf %2, %4 : vector<32x8xf32>
    %cst_5 = arith.constant 0.000000e+00 : f32
    %6 = vector.broadcast %cst_5 : f32 to vector<32x8xf32>
    %7 = arith.maximumf %5, %6 : vector<32x8xf32>
    %c0_6 = arith.constant 0 : index
    %c0_7 = arith.constant 0 : index
    %8 = vector.load %arg4[%c0_6, %c0_7] : memref<8x8xf32, #tpu.memory_space<vmem>>, vector<8x8xf32>
    %cst_8 = arith.constant dense<0.000000e+00> : vector<32x8xf32>
    %9 = tpu.matmul %7, %8, %cst_8 {dimension_numbers = #tpu.dot_dimension_numbers<[1], [0], [0], [1], [0, 0, 1, 1], [], []>} : vector<32x8xf32>, vector<8x8xf32>, vector<32x8xf32> -> vector<32x8xf32>
    %c0_9 = arith.constant 0 : index
    %c0_10 = arith.constant 0 : index
    %10 = vector.load %arg5[%c0_9, %c0_10] : memref<1x8xf32, #tpu.memory_space<vmem>>, vector<1x8xf32>
    %11 = vector.broadcast %10 : vector<1x8xf32> to vector<32x8xf32>
    %12 = arith.addf %9, %11 : vector<32x8xf32>
    %cst_11 = arith.constant 0.000000e+00 : f32
    %13 = vector.broadcast %cst_11 : f32 to vector<32x8xf32>
    %14 = arith.maximumf %12, %13 : vector<32x8xf32>
    %c0_12 = arith.constant 0 : index
    %c0_13 = arith.constant 0 : index
    %15 = vector.load %arg6[%c0_12, %c0_13] : memref<8x8xf32, #tpu.memory_space<vmem>>, vector<8x8xf32>
    %cst_14 = arith.constant dense<0.000000e+00> : vector<32x8xf32>
    %16 = tpu.matmul %14, %15, %cst_14 {dimension_numbers = #tpu.dot_dimension_numbers<[1], [0], [0], [1], [0, 0, 1, 1], [], []>} : vector<32x8xf32>, vector<8x8xf32>, vector<32x8xf32> -> vector<32x8xf32>
    %c0_15 = arith.constant 0 : index
    %c0_16 = arith.constant 0 : index
    %17 = vector.load %arg7[%c0_15, %c0_16] : memref<1x8xf32, #tpu.memory_space<vmem>>, vector<1x8xf32>
    %18 = vector.broadcast %17 : vector<1x8xf32> to vector<32x8xf32>
    %19 = arith.addf %16, %18 : vector<32x8xf32>
    %20 = arith.mulf %19, %19 : vector<32x8xf32>
    %cst_17 = arith.constant dense<0.000000e+00> : vector<32xf32>
    %21 = vector.multi_reduction <add>, %20, %cst_17 [1] : vector<32x8xf32> to vector<32xf32>
    %22 = vector.shape_cast %21 : vector<32xf32> to vector<32x1xf32>
    %cst_18 = arith.constant 1.000000e-24 : f32
    %23 = vector.broadcast %cst_18 : f32 to vector<32x1xf32>
    %24 = arith.maximumf %22, %23 : vector<32x1xf32>
    %25 = math.rsqrt %24 : vector<32x1xf32>
    %26 = vector.broadcast %25 : vector<32x1xf32> to vector<32x8xf32>
    %27 = arith.mulf %19, %26 : vector<32x8xf32>
    %c0_19 = arith.constant 0 : index
    %c0_20 = arith.constant 0 : index
    %28 = vector.load %arg8[%c0_19, %c0_20] : memref<32x8xf32, #tpu.memory_space<vmem>>, vector<32x8xf32>
    tpu.vector_store %arg8[%c0_19, %c0_20], %27 {strides = array<i32>} : memref<32x8xf32, #tpu.memory_space<vmem>>, vector<32x8xf32>,
    %c0_21 = arith.constant 0 : index
    %c0_22 = arith.constant 0 : index
    %29 = vector.load %arg1[%c0_21, %c0_22] : memref<24x8xf32, #tpu.memory_space<vmem>>, vector<24x8xf32>
    %30 = tpu.transpose %29, [1, 0] : vector<24x8xf32> -> vector<8x24xf32>
    %cst_23 = arith.constant dense<0.000000e+00> : vector<24x24xf32>
    %31 = tpu.matmul %29, %30, %cst_23 {dimension_numbers = #tpu.dot_dimension_numbers<[1], [0], [0], [1], [0, 0, 1, 1], [], []>} : vector<24x8xf32>, vector<8x24xf32>, vector<24x24xf32> -> vector<24x24xf32>
    %32 = arith.mulf %29, %29 : vector<24x8xf32>
    %cst_24 = arith.constant dense<0.000000e+00> : vector<24xf32>
    %33 = vector.multi_reduction <add>, %32, %cst_24 [1] : vector<24x8xf32> to vector<24xf32>
    %34 = vector.shape_cast %33 : vector<24xf32> to vector<24x1xf32>
    %35 = arith.mulf %30, %30 : vector<8x24xf32>
    %cst_25 = arith.constant dense<0.000000e+00> : vector<24xf32>
    %36 = vector.multi_reduction <add>, %35, %cst_25 [0] : vector<8x24xf32> to vector<24xf32>
    %37 = vector.shape_cast %36 : vector<24xf32> to vector<1x24xf32>
    %38 = vector.broadcast %34 : vector<24x1xf32> to vector<24x24xf32>
    %39 = vector.broadcast %37 : vector<1x24xf32> to vector<24x24xf32>
    %40 = arith.addf %38, %39 : vector<24x24xf32>
    %cst_26 = arith.constant 2.000000e+00 : f32
    %41 = vector.broadcast %cst_26 : f32 to vector<24x24xf32>
    %42 = arith.mulf %41, %31 : vector<24x24xf32>
    %43 = arith.subf %40, %42 : vector<24x24xf32>
    %cst_27 = arith.constant 0.000000e+00 : f32
    %44 = vector.broadcast %cst_27 : f32 to vector<24x24xf32>
    %45 = arith.maximumf %43, %44 : vector<24x24xf32>
    %46 = math.sqrt %45 : vector<24x24xf32>
    %c0_28 = arith.constant 0 : index
    %c0_29 = arith.constant 0 : index
    %47 = vector.load %arg9[%c0_28, %c0_29] : memref<24x24xf32, #tpu.memory_space<vmem>>, vector<24x24xf32>
    tpu.vector_store %arg9[%c0_28, %c0_29], %46 {strides = array<i32>} : memref<24x24xf32, #tpu.memory_space<vmem>>, vector<24x24xf32>,
    %48 = tpu.transpose %27, [1, 0] : vector<32x8xf32> -> vector<8x32xf32>
    %cst_30 = arith.constant dense<0.000000e+00> : vector<32x32xf32>
    %49 = tpu.matmul %27, %48, %cst_30 {dimension_numbers = #tpu.dot_dimension_numbers<[1], [0], [0], [1], [0, 0, 1, 1], [], []>} : vector<32x8xf32>, vector<8x32xf32>, vector<32x32xf32> -> vector<32x32xf32>
    %50 = arith.mulf %27, %27 : vector<32x8xf32>
    %cst_31 = arith.constant dense<0.000000e+00> : vector<32xf32>
    %51 = vector.multi_reduction <add>, %50, %cst_31 [1] : vector<32x8xf32> to vector<32xf32>
    %52 = vector.shape_cast %51 : vector<32xf32> to vector<32x1xf32>
    %53 = arith.mulf %48, %48 : vector<8x32xf32>
    %cst_32 = arith.constant dense<0.000000e+00> : vector<32xf32>
    %54 = vector.multi_reduction <add>, %53, %cst_32 [0] : vector<8x32xf32> to vector<32xf32>
    %55 = vector.shape_cast %54 : vector<32xf32> to vector<1x32xf32>
    %56 = vector.broadcast %52 : vector<32x1xf32> to vector<32x32xf32>
    %57 = vector.broadcast %55 : vector<1x32xf32> to vector<32x32xf32>
    %58 = arith.addf %56, %57 : vector<32x32xf32>
    %cst_33 = arith.constant 2.000000e+00 : f32
    %59 = vector.broadcast %cst_33 : f32 to vector<32x32xf32>
    %60 = arith.mulf %59, %49 : vector<32x32xf32>
    %61 = arith.subf %58, %60 : vector<32x32xf32>
    %cst_34 = arith.constant 0.000000e+00 : f32
    %62 = vector.broadcast %cst_34 : f32 to vector<32x32xf32>
    %63 = arith.maximumf %61, %62 : vector<32x32xf32>
    %64 = math.sqrt %63 : vector<32x32xf32>
    %cst_35 = arith.constant 2.000000e+00 : f32
    %65 = vector.broadcast %cst_35 : f32 to vector<32x32xf32>
    %66 = arith.subf %65, %64 : vector<32x32xf32>
    %cst_36 = arith.constant 0.000000e+00 : f32
    %67 = vector.broadcast %cst_36 : f32 to vector<32x32xf32>
    %68 = arith.maximumf %66, %67 : vector<32x32xf32>
    %69 = tpu.iota {dimensions = array<i32: 0>} : vector<32x32xi32>
    %70 = tpu.iota {dimensions = array<i32: 1>} : vector<32x32xi32>
    %71 = arith.cmpi sgt, %70, %69 : vector<32x32xi32>
    %cst_37 = arith.constant 0.000000e+00 : f32
    %72 = vector.broadcast %cst_37 : f32 to vector<32x32xf32>
    %73 = arith.select %71, %68, %72 : vector<32x32xi1>, vector<32x32xf32>
    %cst_38 = arith.constant dense<0.000000e+00> : vector<32xf32>
    %74 = vector.multi_reduction <add>, %73, %cst_38 [1] : vector<32x32xf32> to vector<32xf32>
    %75 = vector.shape_cast %74 : vector<32xf32> to vector<32x1xf32>
    %cst_39 = arith.constant dense<0.000000e+00> : vector<1xf32>
    %76 = vector.multi_reduction <add>, %75, %cst_39 [0] : vector<32x1xf32> to vector<1xf32>
    %77 = vector.shape_cast %76 : vector<1xf32> to vector<1x1xf32>
    %cst_40 = arith.constant 0.00201612897 : f32
    %78 = vector.broadcast %cst_40 : f32 to vector<1x1xf32>
    %79 = arith.mulf %77, %78 : vector<1x1xf32>
    %c0_41 = arith.constant 0 : index
    %c0_42 = arith.constant 0 : index
    %80 = vector.load %arg11[%c0_41, %c0_42] : memref<1x1xf32, #tpu.memory_space<vmem>>, vector<1x1xf32>
    tpu.vector_store %arg11[%c0_41, %c0_42], %79 {strides = array<i32>} : memref<1x1xf32, #tpu.memory_space<vmem>>, vector<1x1xf32>,
    %c0_43 = arith.constant 0 : index
    %c0_44 = arith.constant 0 : index
    %81 = vector.load %arg11[%c0_43, %c0_44] : memref<1x1xf32, #tpu.memory_space<vmem>>, vector<1x1xf32>
    %82 = vector.extract %81[0, 0] : f32 from vector<1x1xf32>
    %c0_45 = arith.constant 0 : index
    %c0_46 = arith.constant 0 : index
    %83 = memref.load %arg10[%c0_45, %c0_46] : memref<1x1xf32, #tpu.memory_space<smem>>
    memref.store %82, %arg10[%c0_45, %c0_46] : memref<1x1xf32, #tpu.memory_space<smem>>
    return
  }
}

</mosaic_0001>

<llo_original>
// kernel: proto_forward.1
$region0: #{proto_forward.1}
  #allocation0 [shape = 'u32[]', space=smem, size = 0x4, offset = 0x4, fixed_abs, tag = 'smem constant byte address 0x4 - core index']
  #allocation1 [shape = 'u32[144,128]{1,0:T(1,128)}', space=vmem, size = 0x12000, scoped, tag = 'internal scratch']
  #allocation2 [shape = 'f32[1,1]{1,0:T(1,128)}', space=vmem, size = 0x200, scoped, tag = 'scratch operand']
  %s0 = inlined_call_operand.vmem [shape: f32[32,8], index: 0, kind: input, shape index: {}]
  %s1 = inlined_call_operand.vmem [shape: f32[24,8], index: 1, kind: input, shape index: {}]
  %s2 = inlined_call_operand.vmem [shape: f32[8,8], index: 2, kind: input, shape index: {}]
  %s3 = inlined_call_operand.vmem [shape: f32[1,8], index: 3, kind: input, shape index: {}]
  %s4 = inlined_call_operand.vmem [shape: f32[8,8], index: 4, kind: input, shape index: {}]
  %s5 = inlined_call_operand.vmem [shape: f32[1,8], index: 5, kind: input, shape index: {}]
  %s6 = inlined_call_operand.vmem [shape: f32[8,8], index: 6, kind: input, shape index: {}]
  %s7 = inlined_call_operand.vmem [shape: f32[1,8], index: 7, kind: input, shape index: {}]
  %s8 = inlined_call_operand.vmem [shape: f32[32,8], index: 8, kind: output, shape index: {0}]
  %s9 = inlined_call_operand.hbm [shape: f32[24,24], index: 9, kind: output, shape index: {1}]
  %s10 = inlined_call_operand.hbm [shape: f32[1,1], index: 10, kind: output, shape index: {2}]
  %11 = xla_tuple %s8, %s9, %s10
  %s12 = sld [smem:[#allocation0]]
  $region58: #{proto_forward.1} parent=0
    _
  %s14 = ssub.s32 1, %s12
  %s15 = scalar_select 0, %s14, %s12
  $region1: #{proto_forward.1} parent=0
    #allocation3 [shape = 'u8[12288]{0}', space=vmem, size = 0x3000, scoped, tag = 'output window, operand 1, single buffered']
    #allocation4 [shape = 's32[1]{0}', space=sflag, size = 0x4, scoped, tag = 'scoped memory for proto_forward.1']
    #allocation5 [shape = 's32[1]{0}', space=sflag, size = 0x4, scoped, tag = 'scoped memory for proto_forward.1']
    #allocation6 [shape = 'u8[512]{0}', space=smem, size = 0x200, scoped, tag = 'output window, operand 2, single buffered']
    %16 = vsyncpa [#allocation4], 0
    %17 = vsyncpa [#allocation5], 0
    // Predicated region
    $region2: #{proto_forward.1} parent=1 // pred_check
      _
    $region3: #{proto_forward.1} parent=1 // pred_check_branch
      %19 = sbr.rel (0) target = $region5
    $region4: #{proto_forward.1} parent=1 // pred_region
      _
    $region5: #{proto_forward.1} parent=1 // pred_fallthru
      _
    // Predicated region
    $region6: #{proto_forward.1} parent=1 // pred_check
      _
    $region7: #{proto_forward.1} parent=1 // pred_check_branch
      %21 = sbr.rel (0) target = $region9
    $region8: #{proto_forward.1} parent=1 // pred_region
      _
    $region9: #{proto_forward.1} parent=1 // pred_fallthru
      _
    // Predicated region
    $region10: #{proto_forward.1} parent=1 // pred_check
      _
    $region11: #{proto_forward.1} parent=1 // pred_check_branch
      %23 = sbr.rel (0) target = $region13
    $region12: #{proto_forward.1} parent=1 // pred_region
      _
    $region13: #{proto_forward.1} parent=1 // pred_fallthru
      _
    // Predicated region
    $region14: #{proto_forward.1} parent=1 // pred_check
      _
    $region15: #{proto_forward.1} parent=1 // pred_check_branch
      %25 = sbr.rel (0) target = $region17
    $region16: #{proto_forward.1} parent=1 // pred_region
      _
    $region17: #{proto_forward.1} parent=1 // pred_fallthru
      _
    // Predicated region
    $region18: #{proto_forward.1} parent=1 // pred_check
      _
    $region19: #{proto_forward.1} parent=1 // pred_check_branch
      %27 = sbr.rel (0) target = $region21
    $region20: #{proto_forward.1} parent=1 // pred_region
      _
    $region21: #{proto_forward.1} parent=1 // pred_fallthru
      _
    // Predicated region
    $region22: #{proto_forward.1} parent=1 // pred_check
      _
    $region23: #{proto_forward.1} parent=1 // pred_check_branch
      %29 = sbr.rel (0) target = $region25
    $region24: #{proto_forward.1} parent=1 // pred_region
      _
    $region25: #{proto_forward.1} parent=1 // pred_fallthru
      _
    // Predicated region
    $region26: #{proto_forward.1} parent=1 // pred_check
      _
    $region27: #{proto_forward.1} parent=1 // pred_check_branch
      %31 = sbr.rel (0) target = $region29
    $region28: #{proto_forward.1} parent=1 // pred_region
      _
    $region29: #{proto_forward.1} parent=1 // pred_fallthru
      _
    // Predicated region
    $region30: #{proto_forward.1} parent=1 // pred_check
      _
    $region31: #{proto_forward.1} parent=1 // pred_check_branch
      %33 = sbr.rel (0) target = $region33
    $region32: #{proto_forward.1} parent=1 // pred_region
      _
    $region33: #{proto_forward.1} parent=1 // pred_fallthru
      _
    %v34 = vld [vmem:[%s0] sm:$0xff]
    %v35 = vld [vmem:[%s0 + $0x8] sm:$0xff]
    %v36 = vld [vmem:[%s0 + $0x10] sm:$0xff]
    %v37 = vld [vmem:[%s0 + $0x18] sm:$0xff]
    %v38 = vld [vmem:[%s2] sm:$0xff]
    %v39 = vld [vmem:[%s3] sm:$0x1]
    %v41 = vlaneseq
    %v42 = vshrl.u32 %v41, 7
    %v43 = vsub.s32 0, %v42
    %v44 = vrot.slane %v39, %v43
    %vm46 = vcmask 64512
    %v48 = vsel %vm46, %v34, 0
    %v51 = vsel %vm46, %v35, 0
    %v54 = vsel %vm46, %v36, 0
    %v57 = vsel %vm46, %v37, 0
    %59 = vmatprep.subr.mxu0 0.0
    %60 = vmatpush1.msra.mxu0 %v38
    %61 = vmatprep.subr.mxu0 0.0
    %62 = vmatpush1.msra.mxu0 0.0
    %63 = vmatprep.subr.mxu0 0.0
    %64 = vmatpush1.msra.mxu0 0.0
    %65 = vmatprep.subr.mxu0 0.0
    %66 = vmatpush1.msra.mxu0 0.0
    %67 = vmatprep.subr.mxu0 0.0
    %68 = vmatpush1.msra.mxu0 0.0
    %69 = vmatprep.subr.mxu0 0.0
    %70 = vmatpush1.msra.mxu0 0.0
    %71 = vmatprep.subr.mxu0 0.0
    %72 = vmatpush1.msra.mxu0 0.0
    %73 = vmatprep.subr.mxu0 0.0
    %74 = vmatpush1.msra.mxu0 0.0
    %75 = vmatprep.subr.mxu0 0.0
    %76 = vmatpush1.msra.mxu0 0.0
    %77 = vmatprep.subr.mxu0 0.0
    %78 = vmatpush1.msra.mxu0 0.0
    %79 = vmatprep.subr.mxu0 0.0
    %80 = vmatpush1.msra.mxu0 0.0
    %81 = vmatprep.subr.mxu0 0.0
    %82 = vmatpush1.msra.mxu0 0.0
    %83 = vmatprep.subr.mxu0 0.0
    %84 = vmatpush1.msra.mxu0 0.0
    %85 = vmatprep.subr.mxu0 0.0
    %86 = vmatpush1.msra.mxu0 0.0
    %87 = vmatprep.subr.mxu0 0.0
    %88 = vmatpush1.msra.mxu0 0.0
    %89 = vmatprep.subr.mxu0 0.0
    %90 = vmatpush1.msra.mxu0 0.0
    %91 = vmatprep.subr.mxu0 0.0
    %92 = vmatpush1.msra.mxu0 0.0
    %93 = vmatprep.subr.mxu0 0.0
    %94 = vmatpush1.msra.mxu0 0.0
    %95 = vmatprep.subr.mxu0 0.0
    %96 = vmatpush1.msra.mxu0 0.0
    %97 = vmatprep.subr.mxu0 0.0
    %98 = vmatpush1.msra.mxu0 0.0
    %99 = vmatprep.subr.mxu0 0.0
    %100 = vmatpush1.msra.mxu0 0.0
    %101 = vmatprep.subr.mxu0 0.0
    %102 = vmatpush1.msra.mxu0 0.0
    %103 = vmatprep.subr.mxu0 0.0
    %104 = vmatpush1.msra.mxu0 0.0
    %105 = vmatprep.subr.mxu0 0.0
    %106 = vmatpush1.msra.mxu0 0.0
    %107 = vmatprep.subr.mxu0 0.0
    %108 = vmatpush1.msra.mxu0 0.0
    %109 = vmatprep.subr.mxu0 0.0
    %110 = vmatpush1.msra.mxu0 0.0
    %111 = vmatprep.subr.mxu0 0.0
    %112 = vmatpush1.msra.mxu0 0.0
    %113 = vmatprep.subr.mxu0 0.0
    %114 = vmatpush1.msra.mxu0 0.0
    %115 = vmatprep.subr.mxu0 0.0
    %116 = vmatpush1.msra.mxu0 0.0
    %117 = vmatprep.subr.mxu0 0.0
    %118 = vmatpush1.msra.mxu0 0.0
    %119 = vmatprep.subr.mxu0 0.0
    %120 = vmatpush1.msra.mxu0 0.0
    %121 = vmatprep.subr.mxu0 0.0
    %122 = vmatpush1.msra.mxu0 0.0
    %123 = vmatprep.mubr.f32.mxu0 0.0
    %124 = vmatmul.mubr.f32.gmra.mrb[0].mxu0 %v48
    %v125 = vpop.f32.mrb[0].mxu0
    %v126 = vadd.f32 %v44, %v125
    %v127 = vpop.f32.mrb[0].mxu0
    %128 = vmatprep.mubr.f32.mxu0 0.0
    %129 = vmatmul.mubr.f32.gmra.mrb[0].mxu0 %v51
    %v130 = vpop.f32.mrb[0].mxu0
    %v131 = vadd.f32 %v44, %v130
    %v132 = vpop.f32.mrb[0].mxu0
    %133 = vmatprep.mubr.f32.mxu0 0.0
    %134 = vmatmul.mubr.f32.gmra.mrb[0].mxu0 %v54
    %v135 = vpop.f32.mrb[0].mxu0
    %v136 = vadd.f32 %v44, %v135
    %v137 = vpop.f32.mrb[0].mxu0
    %138 = vmatprep.mubr.f32.mxu0 0.0
    %139 = vmatmul.mubr.f32.gmra.mrb[0].mxu0 %v57
    %v140 = vpop.f32.mrb[0].mxu0
    %v141 = vadd.f32 %v44, %v140
    %v142 = vpop.f32.mrb[0].mxu0
    %143 = vdwg.mxu0
    %v144 = vmax.f32 %v126, 0.0
    %v145 = vmax.f32 %v131, 0.0
    %v146 = vmax.f32 %v136, 0.0
    %v147 = vmax.f32 %v141, 0.0
    %v148 = vld [vmem:[%s4] sm:$0xff]
    %v149 = vld [vmem:[%s5] sm:$0x1]
    %v151 = vlaneseq
    %v152 = vshrl.u32 %v151, 7
    %v153 = vsub.s32 0, %v152
    %v154 = vrot.slane %v149, %v153
    %v157 = vsel %vm46, %v144, 0
    %v160 = vsel %vm46, %v145, 0
    %v163 = vsel %vm46, %v146, 0
    %v166 = vsel %vm46, %v147, 0
    %168 = vmatprep.subr.mxu0 0.0
    %169 = vmatpush1.msra.mxu0 %v148
    %170 = vmatprep.subr.mxu0 0.0
    %171 = vmatpush1.msra.mxu0 0.0
    %172 = vmatprep.subr.mxu0 0.0
    %173 = vmatpush1.msra.mxu0 0.0
    %174 = vmatprep.subr.mxu0 0.0
    %175 = vmatpush1.msra.mxu0 0.0
    %176 = vmatprep.subr.mxu0 0.0
    %177 = vmatpush1.msra.mxu0 0.0
    %178 = vmatprep.subr.mxu0 0.0
    %179 = vmatpush1.msra.mxu0 0.0
    %180 = vmatprep.subr.mxu0 0.0
    %181 = vmatpush1.msra.mxu0 0.0
    %182 = vmatprep.subr.mxu0 0.0
    %183 = vmatpush1.msra.mxu0 0.0
    %184 = vmatprep.subr.mxu0 0.0
    %185 = vmatpush1.msra.mxu0 0.0
    %186 = vmatprep.subr.mxu0 0.0
    %187 = vmatpush1.msra.mxu0 0.0
    %188 = vmatprep.subr.mxu0 0.0
    %189 = vmatpush1.msra.mxu0 0.0
    %190 = vmatprep.subr.mxu0 0.0
    %191 = vmatpush1.msra.mxu0 0.0
    %192 = vmatprep.subr.mxu0 0.0
    %193 = vmatpush1.msra.mxu0 0.0
    %194 = vmatprep.subr.mxu0 0.0
    %195 = vmatpush1.msra.mxu0 0.0
    %196 = vmatprep.subr.mxu0 0.0
    %197 = vmatpush1.msra.mxu0 0.0
    %198 = vmatprep.subr.mxu0 0.0
    %199 = vmatpush1.msra.mxu0 0.0
    %200 = vmatprep.subr.mxu0 0.0
    %201 = vmatpush1.msra.mxu0 0.0
    %202 = vmatprep.subr.mxu0 0.0
    %203 = vmatpush1.msra.mxu0 0.0
    %204 = vmatprep.subr.mxu0 0.0
    %205 = vmatpush1.msra.mxu0 0.0
    %206 = vmatprep.subr.mxu0 0.0
    %207 = vmatpush1.msra.mxu0 0.0
    %208 = vmatprep.subr.mxu0 0.0
    %209 = vmatpush1.msra.mxu0 0.0
    %210 = vmatprep.subr.mxu0 0.0
    %211 = vmatpush1.msra.mxu0 0.0
    %212 = vmatprep.subr.mxu0 0.0
    %213 = vmatpush1.msra.mxu0 0.0
    %214 = vmatprep.subr.mxu0 0.0
    %215 = vmatpush1.msra.mxu0 0.0
    %216 = vmatprep.subr.mxu0 0.0
    %217 = vmatpush1.msra.mxu0 0.0
    %218 = vmatprep.subr.mxu0 0.0
    %219 = vmatpush1.msra.mxu0 0.0
    %220 = vmatprep.subr.mxu0 0.0
    %221 = vmatpush1.msra.mxu0 0.0
    %222 = vmatprep.subr.mxu0 0.0
    %223 = vmatpush1.msra.mxu0 0.0
    %224 = vmatprep.subr.mxu0 0.0
    %225 = vmatpush1.msra.mxu0 0.0
    %226 = vmatprep.subr.mxu0 0.0
    %227 = vmatpush1.msra.mxu0 0.0
    %228 = vmatprep.subr.mxu0 0.0
    %229 = vmatpush1.msra.mxu0 0.0
    %230 = vmatprep.subr.mxu0 0.0
    %231 = vmatpush1.msra.mxu0 0.0
    %232 = vmatprep.mubr.f32.mxu0 0.0
    %233 = vmatmul.mubr.f32.gmra.mrb[0].mxu0 %v157
    %v234 = vpop.f32.mrb[0].mxu0
    %v235 = vadd.f32 %v154, %v234
    %v236 = vpop.f32.mrb[0].mxu0
    %237 = vmatprep.mubr.f32.mxu0 0.0
    %238 = vmatmul.mubr.f32.gmra.mrb[0].mxu0 %v160
    %v239 = vpop.f32.mrb[0].mxu0
    %v240 = vadd.f32 %v154, %v239
    %v241 = vpop.f32.mrb[0].mxu0
    %242 = vmatprep.mubr.f32.mxu0 0.0
    %243 = vmatmul.mubr.f32.gmra.mrb[0].mxu0 %v163
    %v244 = vpop.f32.mrb[0].mxu0
    %v245 = vadd.f32 %v154, %v244
    %v246 = vpop.f32.mrb[0].mxu0
    %247 = vmatprep.mubr.f32.mxu0 0.0
    %248 = vmatmul.mubr.f32.gmra.mrb[0].mxu0 %v166
    %v249 = vpop.f32.mrb[0].mxu0
    %v250 = vadd.f32 %v154, %v249
    %v251 = vpop.f32.mrb[0].mxu0
    %252 = vdwg.mxu0
    %v253 = vmax.f32 %v235, 0.0
    %v254 = vmax.f32 %v240, 0.0
    %v255 = vmax.f32 %v245, 0.0
    %v256 = vmax.f32 %v250, 0.0
    %v257 = vld [vmem:[%s6] sm:$0xff]
    %v258 = vld [vmem:[%s7] sm:$0x1]
    %v260 = vlaneseq
    %v261 = vshrl.u32 %v260, 7
    %v262 = vsub.s32 0, %v261
    %v263 = vrot.slane %v258, %v262
    %v266 = vsel %vm46, %v253, 0
    %v269 = vsel %vm46, %v254, 0
    %v272 = vsel %vm46, %v255, 0
    %v275 = vsel %vm46, %v256, 0
    %277 = vmatprep.subr.mxu0 0.0
    %278 = vmatpush1.msra.mxu0 %v257
    %279 = vmatprep.subr.mxu0 0.0
    %280 = vmatpush1.msra.mxu0 0.0
    %281 = vmatprep.subr.mxu0 0.0
    %282 = vmatpush1.msra.mxu0 0.0
    %283 = vmatprep.subr.mxu0 0.0
    %284 = vmatpush1.msra.mxu0 0.0
    %285 = vmatprep.subr.mxu0 0.0
    %286 = vmatpush1.msra.mxu0 0.0
    %287 = vmatprep.subr.mxu0 0.0
    %288 = vmatpush1.msra.mxu0 0.0
    %289 = vmatprep.subr.mxu0 0.0
    %290 = vmatpush1.msra.mxu0 0.0
    %291 = vmatprep.subr.mxu0 0.0
    %292 = vmatpush1.msra.mxu0 0.0
    %293 = vmatprep.subr.mxu0 0.0
    %294 = vmatpush1.msra.mxu0 0.0
    %295 = vmatprep.subr.mxu0 0.0
    %296 = vmatpush1.msra.mxu0 0.0
    %297 = vmatprep.subr.mxu0 0.0
    %298 = vmatpush1.msra.mxu0 0.0
    %299 = vmatprep.subr.mxu0 0.0
    %300 = vmatpush1.msra.mxu0 0.0
    %301 = vmatprep.subr.mxu0 0.0
    %302 = vmatpush1.msra.mxu0 0.0
    %303 = vmatprep.subr.mxu0 0.0
    %304 = vmatpush1.msra.mxu0 0.0
    %305 = vmatprep.subr.mxu0 0.0
    %306 = vmatpush1.msra.mxu0 0.0
    %307 = vmatprep.subr.mxu0 0.0
    %308 = vmatpush1.msra.mxu0 0.0
    %309 = vmatprep.subr.mxu0 0.0
    %310 = vmatpush1.msra.mxu0 0.0
    %311 = vmatprep.subr.mxu0 0.0
    %312 = vmatpush1.msra.mxu0 0.0
    %313 = vmatprep.subr.mxu0 0.0
    %314 = vmatpush1.msra.mxu0 0.0
    %315 = vmatprep.subr.mxu0 0.0
    %316 = vmatpush1.msra.mxu0 0.0
    %317 = vmatprep.subr.mxu0 0.0
    %318 = vmatpush1.msra.mxu0 0.0
    %319 = vmatprep.subr.mxu0 0.0
    %320 = vmatpush1.msra.mxu0 0.0
    %321 = vmatprep.subr.mxu0 0.0
    %322 = vmatpush1.msra.mxu0 0.0
    %323 = vmatprep.subr.mxu0 0.0
    %324 = vmatpush1.msra.mxu0 0.0
    %325 = vmatprep.subr.mxu0 0.0
    %326 = vmatpush1.msra.mxu0 0.0
    %327 = vmatprep.subr.mxu0 0.0
    %328 = vmatpush1.msra.mxu0 0.0
    %329 = vmatprep.subr.mxu0 0.0
    %330 = vmatpush1.msra.mxu0 0.0
    %331 = vmatprep.subr.mxu0 0.0
    %332 = vmatpush1.msra.mxu0 0.0
    %333 = vmatprep.subr.mxu0 0.0
    %334 = vmatpush1.msra.mxu0 0.0
    %335 = vmatprep.subr.mxu0 0.0
    %336 = vmatpush1.msra.mxu0 0.0
    %337 = vmatprep.subr.mxu0 0.0
    %338 = vmatpush1.msra.mxu0 0.0
    %339 = vmatprep.subr.mxu0 0.0
    %340 = vmatpush1.msra.mxu0 0.0
    %341 = vmatprep.mubr.f32.mxu0 0.0
    %342 = vmatmul.mubr.f32.gmra.mrb[0].mxu0 %v266
    %v343 = vpop.f32.mrb[0].mxu0
    %v344 = vadd.f32 %v263, %v343
    %v345 = vpop.f32.mrb[0].mxu0
    %346 = vmatprep.mubr.f32.mxu0 0.0
    %347 = vmatmul.mubr.f32.gmra.mrb[0].mxu0 %v269
    %v348 = vpop.f32.mrb[0].mxu0
    %v349 = vadd.f32 %v263, %v348
    %v350 = vpop.f32.mrb[0].mxu0
    %351 = vmatprep.mubr.f32.mxu0 0.0
    %352 = vmatmul.mubr.f32.gmra.mrb[0].mxu0 %v272
    %v353 = vpop.f32.mrb[0].mxu0
    %v354 = vadd.f32 %v263, %v353
    %v355 = vpop.f32.mrb[0].mxu0
    %356 = vmatprep.mubr.f32.mxu0 0.0
    %357 = vmatmul.mubr.f32.gmra.mrb[0].mxu0 %v275
    %v358 = vpop.f32.mrb[0].mxu0
    %v359 = vadd.f32 %v263, %v358
    %v360 = vpop.f32.mrb[0].mxu0
    %361 = vdwg.mxu0
    %v362 = vmul.f32 %v344, %v344
    %v363 = vmul.f32 %v349, %v349
    %v364 = vmul.f32 %v354, %v354
    %v365 = vmul.f32 %v359, %v359
    %v366 = vsel %vm46, %v362, 0.0
    %367 = vadd.xlane.f32.xlu0 %v366
    %v368 = vpop.xlane.xlu0 %367
    %v369 = vsel %vm46, %v363, 0.0
    %370 = vadd.xlane.f32.xlu0 %v369
    %v371 = vpop.xlane.xlu0 %370
    %v372 = vsel %vm46, %v364, 0.0
    %373 = vadd.xlane.f32.xlu0 %v372
    %v374 = vpop.xlane.xlu0 %373
    %v375 = vsel %vm46, %v365, 0.0
    %376 = vadd.xlane.f32.xlu0 %v375
    %v377 = vpop.xlane.xlu0 %376
    %v378 = vmax.f32 %v368, 1e-24
    %v379 = vmax.f32 %v371, 1e-24
    %v380 = vmax.f32 %v374, 1e-24
    %v381 = vmax.f32 %v377, 1e-24
    %v382 = vrsqrt.pop %v378
    %v383 = vrsqrt.pop %v379
    %v384 = vrsqrt.pop %v380
    %v385 = vrsqrt.pop %v381
    %v386 = vmul.f32 %v344, %v382
    %v387 = vmul.f32 %v349, %v383
    %v388 = vmul.f32 %v354, %v384
    %v389 = vmul.f32 %v359, %v385
    %390 = vst.msk [vmem:[%s8] sm:$0xff] %vm46, %v386
    %391 = vst.msk [vmem:[%s8 + $0x8] sm:$0xff] %vm46, %v387
    %392 = vst.msk [vmem:[%s8 + $0x10] sm:$0xff] %vm46, %v388
    %393 = vst.msk [vmem:[%s8 + $0x18] sm:$0xff] %vm46, %v389
    %v394 = vld [vmem:[%s1] sm:$0xff]
    %v395 = vld [vmem:[%s1 + $0x8] sm:$0xff]
    %v396 = vld [vmem:[%s1 + $0x10] sm:$0xff]
    %397 = vxpose.xlu0.b32.start [1/16] %v394, 128
    %398 = vxpose.xlu0.b32.cont [2/16] %v395, 128
    %399 = vxpose.xlu0.b32.cont [3/16] %v396, 128
    %400 = vxpose.xlu0.b32.cont [4/16] 0.0, 128
    %401 = vxpose.xlu0.b32.cont [5/16] 0.0, 128
    %402 = vxpose.xlu0.b32.cont [6/16] 0.0, 128
    %403 = vxpose.xlu0.b32.cont [7/16] 0.0, 128
    %404 = vxpose.xlu0.b32.cont [8/16] 0.0, 128
    %405 = vxpose.xlu0.b32.cont [9/16] 0.0, 128
    %406 = vxpose.xlu0.b32.cont [10/16] 0.0, 128
    %407 = vxpose.xlu0.b32.cont [11/16] 0.0, 128
    %408 = vxpose.xlu0.b32.cont [12/16] 0.0, 128
    %409 = vxpose.xlu0.b32.cont [13/16] 0.0, 128
    %410 = vxpose.xlu0.b32.cont [14/16] 0.0, 128
    %411 = vxpose.xlu0.b32.cont [15/16] 0.0, 128
    %412 = vxpose.xlu0.b32.end [16/16] 0.0, 128
    %v413 = vpop.trf.xlu0
    %v414 = vpop.trf.xlu0
    %v415 = vpop.trf.xlu0
    %v416 = vpop.trf.xlu0
    %v417 = vpop.trf.xlu0
    %v418 = vpop.trf.xlu0
    %v419 = vpop.trf.xlu0
    %v420 = vpop.trf.xlu0
    %v421 = vpop.trf.xlu0
    %v422 = vpop.trf.xlu0
    %v423 = vpop.trf.xlu0
    %v424 = vpop.trf.xlu0
    %v425 = vpop.trf.xlu0
    %v426 = vpop.trf.xlu0
    %v427 = vpop.trf.xlu0
    %v428 = vpop.trf.xlu0
    %v430 = vsel %vm46, %v394, 0
    %v433 = vsel %vm46, %v395, 0
    %v436 = vsel %vm46, %v396, 0
    %438 = vmatprep.subr.mxu0 0.0
    %439 = vmatpush1.msra.mxu0 %v413
    %440 = vmatprep.subr.mxu0 0.0
    %441 = vmatpush1.msra.mxu0 0.0
    %442 = vmatprep.subr.mxu0 0.0
    %443 = vmatpush1.msra.mxu0 0.0
    %444 = vmatprep.subr.mxu0 0.0
    %445 = vmatpush1.msra.mxu0 0.0
    %446 = vmatprep.subr.mxu0 0.0
    %447 = vmatpush1.msra.mxu0 0.0
    %448 = vmatprep.subr.mxu0 0.0
    %449 = vmatpush1.msra.mxu0 0.0
    %450 = vmatprep.subr.mxu0 0.0
    %451 = vmatpush1.msra.mxu0 0.0
    %452 = vmatprep.subr.mxu0 0.0
    %453 = vmatpush1.msra.mxu0 0.0
    %454 = vmatprep.subr.mxu0 0.0
    %455 = vmatpush1.msra.mxu0 0.0
    %456 = vmatprep.subr.mxu0 0.0
    %457 = vmatpush1.msra.mxu0 0.0
    %458 = vmatprep.subr.mxu0 0.0
    %459 = vmatpush1.msra.mxu0 0.0
    %460 = vmatprep.subr.mxu0 0.0
    %461 = vmatpush1.msra.mxu0 0.0
    %462 = vmatprep.subr.mxu0 0.0
    %463 = vmatpush1.msra.mxu0 0.0
    %464 = vmatprep.subr.mxu0 0.0
    %465 = vmatpush1.msra.mxu0 0.0
    %466 = vmatprep.subr.mxu0 0.0
    %467 = vmatpush1.msra.mxu0 0.0
    %468 = vmatprep.subr.mxu0 0.0
    %469 = vmatpush1.msra.mxu0 0.0
    %470 = vmatprep.subr.mxu0 0.0
    %471 = vmatpush1.msra.mxu0 0.0
    %472 = vmatprep.subr.mxu0 0.0
    %473 = vmatpush1.msra.mxu0 0.0
    %474 = vmatprep.subr.mxu0 0.0
    %475 = vmatpush1.msra.mxu0 0.0
    %476 = vmatprep.subr.mxu0 0.0
    %477 = vmatpush1.msra.mxu0 0.0
    %478 = vmatprep.subr.mxu0 0.0
    %479 = vmatpush1.msra.mxu0 0.0
    %480 = vmatprep.subr.mxu0 0.0
    %481 = vmatpush1.msra.mxu0 0.0
    %482 = vmatprep.subr.mxu0 0.0
    %483 = vmatpush1.msra.mxu0 0.0
    %484 = vmatprep.subr.mxu0 0.0
    %485 = vmatpush1.msra.mxu0 0.0
    %486 = vmatprep.subr.mxu0 0.0
    %487 = vmatpush1.msra.mxu0 0.0
    %488 = vmatprep.subr.mxu0 0.0
    %489 = vmatpush1.msra.mxu0 0.0
    %490 = vmatprep.subr.mxu0 0.0
    %491 = vmatpush1.msra.mxu0 0.0
    %492 = vmatprep.subr.mxu0 0.0
    %493 = vmatpush1.msra.mxu0 0.0
    %494 = vmatprep.subr.mxu0 0.0
    %495 = vmatpush1.msra.mxu0 0.0
    %496 = vmatprep.subr.mxu0 0.0
    %497 = vmatpush1.msra.mxu0 0.0
    %498 = vmatprep.subr.mxu0 0.0
    %499 = vmatpush1.msra.mxu0 0.0
    %500 = vmatprep.subr.mxu0 0.0
    %501 = vmatpush1.msra.mxu0 0.0
    %502 = vmatprep.mubr.f32.mxu0 0.0
    %503 = vmatmul.mubr.f32.gmra.mrb[0].mxu0 %v430
    %v504 = vpop.f32.mrb[0].mxu0
    %v505 = vadd.f32 0.0, %v504
    %v506 = vpop.f32.mrb[0].mxu0
    %507 = vmatprep.mubr.f32.mxu0 0.0
    %508 = vmatmul.mubr.f32.gmra.mrb[0].mxu0 %v433
    %v509 = vpop.f32.mrb[0].mxu0
    %v510 = vadd.f32 0.0, %v509
    %v511 = vpop.f32.mrb[0].mxu0
    %512 = vmatprep.mubr.f32.mxu0 0.0
    %513 = vmatmul.mubr.f32.gmra.mrb[0].mxu0 %v436
    %v514 = vpop.f32.mrb[0].mxu0
    %v515 = vadd.f32 0.0, %v514
    %v516 = vpop.f32.mrb[0].mxu0
    %517 = vdwg.mxu0
    %v518 = vmul.f32 %v394, %v394
    %v519 = vmul.f32 %v395, %v395
    %v520 = vmul.f32 %v396, %v396
    %v521 = vsel %vm46, %v518, 0.0
    %522 = vadd.xlane.f32.xlu0 %v521
    %v523 = vpop.xlane.xlu0 %522
    %v524 = vsel %vm46, %v519, 0.0
    %525 = vadd.xlane.f32.xlu0 %v524
    %v526 = vpop.xlane.xlu0 %525
    %v527 = vsel %vm46, %v520, 0.0
    %528 = vadd.xlane.f32.xlu0 %v527
    %v529 = vpop.xlane.xlu0 %528
    %v530 = vmul.f32 %v413, %v413
    %vm531 = vcmask 195584
    %v532 = vsel %vm531, %v530, 0.0
    %v533 = vrot.slane %v532, 4
    %v534 = vadd.f32 %v532, %v533
    %v535 = vrot.slane %v534, 2
    %v536 = vadd.f32 %v534, %v535
    %v537 = vrot.slane %v536, 1
    %v538 = vadd.f32 %v536, %v537
    %v539 = vadd.f32 %v523, %v538
    %v540 = vadd.f32 %v526, %v538
    %v541 = vadd.f32 %v529, %v538
    %v542 = vmul.f32 %v505, 2.0
    %v543 = vmul.f32 %v510, 2.0
    %v544 = vmul.f32 %v515, 2.0
    %v545 = vsub.f32 %v539, %v542
    %v546 = vsub.f32 %v540, %v543
    %v547 = vsub.f32 %v541, %v544
    %v548 = vmax.f32 %v545, 0.0
    %v549 = vmax.f32 %v546, 0.0
    %v550 = vmax.f32 %v547, 0.0
    %v551 = vrsqrt.pop %v548
    %v552 = vmul.f32 %v548, %v551
    %vm553 = vcmp.eq.f32.partialorder %v548, inf
    %v554 = vsel %vm553, %v548, %v552
    %vm555 = vcmp.eq.f32.partialorder %v548, 0.0
    %v556 = vand.u32 %v548, 2147483648
    %v557 = vsel %vm555, %v556, %v554
    %v558 = vrsqrt.pop %v549
    %v559 = vmul.f32 %v549, %v558
    %vm560 = vcmp.eq.f32.partialorder %v549, inf
    %v561 = vsel %vm560, %v549, %v559
    %vm562 = vcmp.eq.f32.partialorder %v549, 0.0
    %v563 = vand.u32 %v549, 2147483648
    %v564 = vsel %vm562, %v563, %v561
    %v565 = vrsqrt.pop %v550
    %v566 = vmul.f32 %v550, %v565
    %vm567 = vcmp.eq.f32.partialorder %v550, inf
    %v568 = vsel %vm567, %v550, %v566
    %vm569 = vcmp.eq.f32.partialorder %v550, 0.0
    %v570 = vand.u32 %v550, 2147483648
    %v571 = vsel %vm569, %v570, %v568
    %572 = vst.msk [vmem:[#allocation3] sm:$0xff] %vm531, %v557
    %573 = vst.msk [vmem:[#allocation3 + $0x8] sm:$0xff] %vm531, %v564
    %574 = vst.msk [vmem:[#allocation3 + $0x10] sm:$0xff] %vm531, %v571
    %575 = vxpose.xlu0.b32.start [1/16] %v386, 128
    %576 = vxpose.xlu0.b32.cont [2/16] %v387, 128
    %577 = vxpose.xlu0.b32.cont [3/16] %v388, 128
    %578 = vxpose.xlu0.b32.cont [4/16] %v389, 128
    %579 = vxpose.xlu0.b32.cont [5/16] 0.0, 128
    %580 = vxpose.xlu0.b32.cont [6/16] 0.0, 128
    %581 = vxpose.xlu0.b32.cont [7/16] 0.0, 128
    %582 = vxpose.xlu0.b32.cont [8/16] 0.0, 128
    %583 = vxpose.xlu0.b32.cont [9/16] 0.0, 128
    %584 = vxpose.xlu0.b32.cont [10/16] 0.0, 128
    %585 = vxpose.xlu0.b32.cont [11/16] 0.0, 128
    %586 = vxpose.xlu0.b32.cont [12/16] 0.0, 128
    %587 = vxpose.xlu0.b32.cont [13/16] 0.0, 128
    %588 = vxpose.xlu0.b32.cont [14/16] 0.0, 128
    %589 = vxpose.xlu0.b32.cont [15/16] 0.0, 128
    %590 = vxpose.xlu0.b32.end [16/16] 0.0, 128
    %v591 = vpop.trf.xlu0
    %v592 = vpop.trf.xlu0
    %v593 = vpop.trf.xlu0
    %v594 = vpop.trf.xlu0
    %v595 = vpop.trf.xlu0
    %v596 = vpop.trf.xlu0
    %v597 = vpop.trf.xlu0
    %v598 = vpop.trf.xlu0
    %v599 = vpop.trf.xlu0
    %v600 = vpop.trf.xlu0
    %v601 = vpop.trf.xlu0
    %v602 = vpop.trf.xlu0
    %v603 = vpop.trf.xlu0
    %v604 = vpop.trf.xlu0
    %v605 = vpop.trf.xlu0
    %v606 = vpop.trf.xlu0
    %v608 = vsel %vm46, %v386, 0
    %v611 = vsel %vm46, %v387, 0
    %v614 = vsel %vm46, %v388, 0
    %v617 = vsel %vm46, %v389, 0
    %619 = vmatprep.subr.mxu0 0.0
    %620 = vmatpush1.msra.mxu0 %v591
    %621 = vmatprep.subr.mxu0 0.0
    %622 = vmatpush1.msra.mxu0 0.0
    %623 = vmatprep.subr.mxu0 0.0
    %624 = vmatpush1.msra.mxu0 0.0
    %625 = vmatprep.subr.mxu0 0.0
    %626 = vmatpush1.msra.mxu0 0.0
    %627 = vmatprep.subr.mxu0 0.0
    %628 = vmatpush1.msra.mxu0 0.0
    %629 = vmatprep.subr.mxu0 0.0
    %630 = vmatpush1.msra.mxu0 0.0
    %631 = vmatprep.subr.mxu0 0.0
    %632 = vmatpush1.msra.mxu0 0.0
    %633 = vmatprep.subr.mxu0 0.0
    %634 = vmatpush1.msra.mxu0 0.0
    %635 = vmatprep.subr.mxu0 0.0
    %636 = vmatpush1.msra.mxu0 0.0
    %637 = vmatprep.subr.mxu0 0.0
    %638 = vmatpush1.msra.mxu0 0.0
    %639 = vmatprep.subr.mxu0 0.0
    %640 = vmatpush1.msra.mxu0 0.0
    %641 = vmatprep.subr.mxu0 0.0
    %642 = vmatpush1.msra.mxu0 0.0
    %643 = vmatprep.subr.mxu0 0.0
    %644 = vmatpush1.msra.mxu0 0.0
    %645 = vmatprep.subr.mxu0 0.0
    %646 = vmatpush1.msra.mxu0 0.0
    %647 = vmatprep.subr.mxu0 0.0
    %648 = vmatpush1.msra.mxu0 0.0
    %649 = vmatprep.subr.mxu0 0.0
    %650 = vmatpush1.msra.mxu0 0.0
    %651 = vmatprep.subr.mxu0 0.0
    %652 = vmatpush1.msra.mxu0 0.0
    %653 = vmatprep.subr.mxu0 0.0
    %654 = vmatpush1.msra.mxu0 0.0
    %655 = vmatprep.subr.mxu0 0.0
    %656 = vmatpush1.msra.mxu0 0.0
    %657 = vmatprep.subr.mxu0 0.0
    %658 = vmatpush1.msra.mxu0 0.0
    %659 = vmatprep.subr.mxu0 0.0
    %660 = vmatpush1.msra.mxu0 0.0
    %661 = vmatprep.subr.mxu0 0.0
    %662 = vmatpush1.msra.mxu0 0.0
    %663 = vmatprep.subr.mxu0 0.0
    %664 = vmatpush1.msra.mxu0 0.0
    %665 = vmatprep.subr.mxu0 0.0
    %666 = vmatpush1.msra.mxu0 0.0
    %667 = vmatprep.subr.mxu0 0.0
    %668 = vmatpush1.msra.mxu0 0.0
    %669 = vmatprep.subr.mxu0 0.0
    %670 = vmatpush1.msra.mxu0 0.0
    %671 = vmatprep.subr.mxu0 0.0
    %672 = vmatpush1.msra.mxu0 0.0
    %673 = vmatprep.subr.mxu0 0.0
    %674 = vmatpush1.msra.mxu0 0.0
    %675 = vmatprep.subr.mxu0 0.0
    %676 = vmatpush1.msra.mxu0 0.0
    %677 = vmatprep.subr.mxu0 0.0
    %678 = vmatpush1.msra.mxu0 0.0
    %679 = vmatprep.subr.mxu0 0.0
    %680 = vmatpush1.msra.mxu0 0.0
    %681 = vmatprep.subr.mxu0 0.0
    %682 = vmatpush1.msra.mxu0 0.0
    %683 = vmatprep.mubr.f32.mxu0 0.0
    %684 = vmatmul.mubr.f32.gmra.mrb[0].mxu0 %v608
    %v685 = vpop.f32.mrb[0].mxu0
    %v686 = vadd.f32 0.0, %v685
    %v687 = vpop.f32.mrb[0].mxu0
    %688 = vmatprep.mubr.f32.mxu0 0.0
    %689 = vmatmul.mubr.f32.gmra.mrb[0].mxu0 %v611
    %v690 = vpop.f32.mrb[0].mxu0
    %v691 = vadd.f32 0.0, %v690
    %v692 = vpop.f32.mrb[0].mxu0
    %693 = vmatprep.mubr.f32.mxu0 0.0
    %694 = vmatmul.mubr.f32.gmra.mrb[0].mxu0 %v614
    %v695 = vpop.f32.mrb[0].mxu0
    %v696 = vadd.f32 0.0, %v695
    %v697 = vpop.f32.mrb[0].mxu0
    %698 = vmatprep.mubr.f32.mxu0 0.0
    %699 = vmatmul.mubr.f32.gmra.mrb[0].mxu0 %v617
    %v700 = vpop.f32.mrb[0].mxu0
    %v701 = vadd.f32 0.0, %v700
    %v702 = vpop.f32.mrb[0].mxu0
    %703 = vdwg.mxu0
    %v704 = vmul.f32 %v386, %v386
    %v705 = vmul.f32 %v387, %v387
    %v706 = vmul.f32 %v388, %v388
    %v707 = vmul.f32 %v389, %v389
    %v708 = vsel %vm46, %v704, 0.0
    %709 = vadd.xlane.f32.xlu0 %v708
    %v710 = vpop.xlane.xlu0 %709
    %v711 = vsel %vm46, %v705, 0.0
    %712 = vadd.xlane.f32.xlu0 %v711
    %v713 = vpop.xlane.xlu0 %712
    %v714 = vsel %vm46, %v706, 0.0
    %715 = vadd.xlane.f32.xlu0 %v714
    %v716 = vpop.xlane.xlu0 %715
    %v717 = vsel %vm46, %v707, 0.0
    %718 = vadd.xlane.f32.xlu0 %v717
    %v719 = vpop.xlane.xlu0 %718
    %v720 = vmul.f32 %v591, %v591
    %vm721 = vcmask 261120
    %v722 = vsel %vm721, %v720, 0.0
    %v723 = vrot.slane %v722, 4
    %v724 = vadd.f32 %v722, %v723
    %v725 = vrot.slane %v724, 2
    %v726 = vadd.f32 %v724, %v725
    %v727 = vrot.slane %v726, 1
    %v728 = vadd.f32 %v726, %v727
    %v729 = vadd.f32 %v710, %v728
    %v730 = vadd.f32 %v713, %v728
    %v731 = vadd.f32 %v716, %v728
    %v732 = vadd.f32 %v719, %v728
    %v733 = vmul.f32 %v686, 2.0
    %v734 = vmul.f32 %v691, 2.0
    %v735 = vmul.f32 %v696, 2.0
    %v736 = vmul.f32 %v701, 2.0
    %v737 = vsub.f32 %v729, %v733
    %v738 = vsub.f32 %v730, %v734
    %v739 = vsub.f32 %v731, %v735
    %v740 = vsub.f32 %v732, %v736
    %v741 = vmax.f32 %v737, 0.0
    %v742 = vmax.f32 %v738, 0.0
    %v743 = vmax.f32 %v739, 0.0
    %v744 = vmax.f32 %v740, 0.0
    %v745 = vrsqrt.pop %v741
    %v746 = vmul.f32 %v741, %v745
    %vm747 = vcmp.eq.f32.partialorder %v741, inf
    %v748 = vsel %vm747, %v741, %v746
    %vm749 = vcmp.eq.f32.partialorder %v741, 0.0
    %v750 = vand.u32 %v741, 2147483648
    %v751 = vsel %vm749, %v750, %v748
    %v752 = vrsqrt.pop %v742
    %v753 = vmul.f32 %v742, %v752
    %vm754 = vcmp.eq.f32.partialorder %v742, inf
    %v755 = vsel %vm754, %v742, %v753
    %vm756 = vcmp.eq.f32.partialorder %v742, 0.0
    %v757 = vand.u32 %v742, 2147483648
    %v758 = vsel %vm756, %v757, %v755
    %v759 = vrsqrt.pop %v743
    %v760 = vmul.f32 %v743, %v759
    %vm761 = vcmp.eq.f32.partialorder %v743, inf
    %v762 = vsel %vm761, %v743, %v760
    %vm763 = vcmp.eq.f32.partialorder %v743, 0.0
    %v764 = vand.u32 %v743, 2147483648
    %v765 = vsel %vm763, %v764, %v762
    %v766 = vrsqrt.pop %v744
    %v767 = vmul.f32 %v744, %v766
    %vm768 = vcmp.eq.f32.partialorder %v744, inf
    %v769 = vsel %vm768, %v744, %v767
    %vm770 = vcmp.eq.f32.partialorder %v744, 0.0
    %v771 = vand.u32 %v744, 2147483648
    %v772 = vsel %vm770, %v771, %v769
    %v773 = vsub.f32 2.0, %v751
    %v774 = vsub.f32 2.0, %v758
    %v775 = vsub.f32 2.0, %v765
    %v776 = vsub.f32 2.0, %v772
    %v777 = vmax.f32 %v773, 0.0
    %v778 = vmax.f32 %v774, 0.0
    %v779 = vmax.f32 %v775, 0.0
    %v780 = vmax.f32 %v776, 0.0
    %v781 = vlaneseq
    %v782 = vshrl.u32 %v781, 7
    %v783 = vadd.s32 %v782, 8
    %v784 = vadd.s32 %v782, 16
    %v785 = vadd.s32 %v782, 24
    %v786 = vlaneseq
    %v787 = vand.u32 %v786, 127
    %vm788 = vcmp.gt.s32.totalorder %v787, %v782
    %vm789 = vcmp.gt.s32.totalorder %v787, %v783
    %vm790 = vcmp.gt.s32.totalorder %v787, %v784
    %vm791 = vcmp.gt.s32.totalorder %v787, %v785
    %v792 = vsel %vm788, %v777, 0.0
    %v793 = vsel %vm789, %v778, 0.0
    %v794 = vsel %vm790, %v779, 0.0
    %v795 = vsel %vm791, %v780, 0.0
    %v796 = vsel %vm721, %v792, 0.0
    %797 = vadd.xlane.f32.xlu0 %v796
    %v798 = vpop.xlane.xlu0 %797
    %v799 = vsel %vm721, %v793, 0.0
    %800 = vadd.xlane.f32.xlu0 %v799
    %v801 = vpop.xlane.xlu0 %800
    %v802 = vsel %vm721, %v794, 0.0
    %803 = vadd.xlane.f32.xlu0 %v802
    %v804 = vpop.xlane.xlu0 %803
    %v805 = vsel %vm721, %v795, 0.0
    %806 = vadd.xlane.f32.xlu0 %v805
    %v807 = vpop.xlane.xlu0 %806
    %v808 = vadd.f32 %v798, %v801
    %v809 = vadd.f32 %v808, %v804
    %v810 = vadd.f32 %v809, %v807
    %v811 = vrot.slane %v810, 4
    %v812 = vadd.f32 %v810, %v811
    %v813 = vrot.slane %v812, 2
    %v814 = vadd.f32 %v812, %v813
    %v815 = vrot.slane %v814, 1
    %v816 = vadd.f32 %v814, %v815
    %v817 = vmul.f32 %v816, 0.002016129
    %vm818 = vcmask 0
    %819 = vst.msk [vmem:[#allocation2] sm:$0x1] %vm818, %v817
    %v820 = vld [vmem:[#allocation2] sm:$0x1]
    %s821 = vtos %v820
    %s822 = scalar_lea.smem [#allocation6], 0
    %823 = sst [smem:[%s822]] %s821
    // Predicated region
    $region34: #{proto_forward.1} parent=1 // pred_check
      _
    $region35: #{proto_forward.1} parent=1 // pred_check_branch
      %825 = sbr.rel (0) target = $region37
    $region36: #{proto_forward.1} parent=1 // pred_region
      _
    $region37: #{proto_forward.1} parent=1 // pred_fallthru
      _
    // Predicated region
    $region38: #{proto_forward.1} parent=1 // pred_check
      _
    $region39: #{proto_forward.1} parent=1 // pred_check_branch
      %827 = sbr.rel (0) target = $region41
    $region40: #{proto_forward.1} parent=1 // pred_region
      %s829 = ssub.s32 384, 384
      %830 = vsyncadd [#allocation4], %s829
      %s831 = sshll.u32 [#allocation3], 4
      %s832 = int_to_ptr.vmem [resolvable:$true] %s831
      %837 = dma.vmem_to_hbm [thread:$0]  %s832, 384, %s9, [#allocation4], 128, 128, 8
    $region41: #{proto_forward.1} parent=1 // pred_fallthru
      _
    // Predicated region
    $region42: #{proto_forward.1} parent=1 // pred_check
      _
    $region43: #{proto_forward.1} parent=1 // pred_check_branch
      %839 = sbr.rel (0) target = $region45
    $region44: #{proto_forward.1} parent=1 // pred_region
      %s841 = ssub.s32 16, 16
      %842 = vsyncadd [#allocation5], %s841
      %845 = dma.smem_to_hbm [#allocation6], 16, %s10, [#allocation5]
    $region45: #{proto_forward.1} parent=1 // pred_fallthru
      _
    // Predicated region
    $region46: #{proto_forward.1} parent=1 // pred_check
      _
    $region47: #{proto_forward.1} parent=1 // pred_check_branch
      %847 = sbr.rel (0) target = $region49
    $region48: #{proto_forward.1} parent=1 // pred_region
      _
    $region49: #{proto_forward.1} parent=1 // pred_fallthru
      _
    // Predicated region
    $region50: #{proto_forward.1} parent=1 // pred_check
      _
    $region51: #{proto_forward.1} parent=1 // pred_check_branch
      %849 = sbr.rel (0) target = $region53
    $region52: #{proto_forward.1} parent=1 // pred_region
      %850 = dma.done [#allocation4], 384
    $region53: #{proto_forward.1} parent=1 // pred_fallthru
      _
    // Predicated region
    $region54: #{proto_forward.1} parent=1 // pred_check
      _
    $region55: #{proto_forward.1} parent=1 // pred_check_branch
      %852 = sbr.rel (0) target = $region57
    $region56: #{proto_forward.1} parent=1 // pred_region
      %853 = dma.done [#allocation5], 16
    $region57: #{proto_forward.1} parent=1 // pred_fallthru
      _
    %854 = sfence
    %855 = vsyncpa [#allocation4], 1
    %856 = vsyncpa [#allocation5], 1

</llo_original>
